<compile_context>
chip_gen: v7x
topology: tpu7x:2x2x1
jax: 0.10.0
libtpu: 0.0.40
codegen_flags: <defaults>
</compile_context>

<pallas_src>
import functools

import jax
import jax.numpy as jnp
from jax.experimental import pallas as pl
from jax.experimental.pallas import tpu as pltpu

BN_EPS = 1e-5


# ----------------------------------------------------------------------------
# Pass 1: full-batch BatchNorm1d statistics (training mode, biased variance),
# folded into:  scale = gamma * rsqrt(var + eps);  shift = beta - mean * scale
# Gridded over batch tiles; sum / sum-of-squares accumulate in VMEM scratch.
# ----------------------------------------------------------------------------
def _bn_stats_kernel(batch_size,
                     x_ref, gamma_ref, beta_ref,
                     scale_ref, shift_ref,
                     sum_ref, sumsq_ref):
    step = pl.program_id(0)

    @pl.when(step == 0)
    def _():
        sum_ref[...] = jnp.zeros_like(sum_ref)
        sumsq_ref[...] = jnp.zeros_like(sumsq_ref)

    x = x_ref[...].astype(jnp.float32)                       # (TB, H)
    sum_ref[...] += jnp.sum(x, axis=0, keepdims=True)
    sumsq_ref[...] += jnp.sum(x * x, axis=0, keepdims=True)

    @pl.when(step == pl.num_programs(0) - 1)
    def _():
        inv_n = jnp.float32(1.0 / batch_size)
        mean = sum_ref[...] * inv_n
        var = jnp.maximum(sumsq_ref[...] * inv_n - mean * mean, 0.0)  # biased
        scale = gamma_ref[...] * jax.lax.rsqrt(var + BN_EPS)
        scale_ref[...] = scale
        shift_ref[...] = beta_ref[...] - mean * scale


# ----------------------------------------------------------------------------
# Pass 2: fused block, gridded over batch tiles ("parallel").
# Weights stay VMEM-resident (constant index_map) and hit the MXU as bf16
# with f32 accumulation; all elementwise work stays f32.
# ----------------------------------------------------------------------------
def _block_kernel(dropout_p, keep_threshold_i32,
                  x_ref, scale_ref, shift_ref,
                  w1_ref, b1_ref, w2_ref, b2_ref, rbits_ref,
                  out_ref):
    x = x_ref[...].astype(jnp.float32)                       # (TB, H)
    xn = x * scale_ref[...] + shift_ref[...]                 # folded BatchNorm

    h = jnp.dot(xn.astype(jnp.bfloat16), w1_ref[...],
                preferred_element_type=jnp.float32)          # (TB, 4H)
    h = jnp.maximum(h + b1_ref[...], 0.0)                    # bias + ReLU

    if dropout_p > 0.0:
        # uniform int32 bits >= threshold  <=>  keep with prob (1 - p)
        keep = rbits_ref[...] >= jnp.int32(keep_threshold_i32)
        h = jnp.where(keep, h, 0.0)

    y = jnp.dot(h.astype(jnp.bfloat16), w2_ref[...],
                preferred_element_type=jnp.float32)          # (TB, H)
    if dropout_p > 0.0:
        y = y * jnp.float32(1.0 / (1.0 - dropout_p))         # post-GEMM scale

    out_ref[...] = (y + b2_ref[...] + x).astype(out_ref.dtype)


def _pick_batch_tile(batch):
    # Prefer a tile that yields >= 2 grid steps (pipelining), else the largest
    # divisor, else the whole batch (block == full array dim is always legal).
    for t in (256, 128, 64, 32, 16, 8):
        if batch % t == 0 and batch // t >= 2:
            return t
    for t in (256, 128, 64, 32, 16, 8):
        if batch % t == 0:
            return t
    return batch


def block_with_dropout(x, gamma, beta, w1, b1, w2, b2, key, *, dropout_p):
    """x: (B, H) f32.  w1: (H, 4H), w2: (4H, H) (already transposed from torch)."""
    if not (0.0 <= dropout_p < 1.0):
        raise ValueError("dropout_p must be in [0, 1)")
    B, H = x.shape
    H4 = 4 * H
    TB = _pick_batch_tile(B)
    grid = (B // TB,)

    gamma2 = gamma.reshape(1, H).astype(jnp.float32)
    beta2 = beta.reshape(1, H).astype(jnp.float32)
    b1_2 = b1.reshape(1, H4).astype(jnp.float32)
    b2_2 = b2.reshape(1, H).astype(jnp.float32)
    w1_bf = w1.astype(jnp.bfloat16)                          # MXU operands in bf16
    w2_bf = w2.astype(jnp.bfloat16)

    # Dropout randomness: uniform 32-bit words, consumed via one int32 compare.
    rbits = jax.lax.bitcast_convert_type(
        jax.random.bits(key, (B, H4), dtype=jnp.uint32), jnp.int32)
    keep_threshold = min(int(round(dropout_p * 2.0 ** 32)) - 2 ** 31, 2 ** 31 - 1)

    # --- pass 1: full-batch BN stats -> folded (scale, shift) ---------------
    scale, shift = pl.pallas_call(
        functools.partial(_bn_stats_kernel, B),
        out_shape=(jax.ShapeDtypeStruct((1, H), jnp.float32),
                   jax.ShapeDtypeStruct((1, H), jnp.float32)),
        grid=grid,
        in_specs=[pl.BlockSpec((TB, H), lambda i: (i, 0)),
                  pl.BlockSpec((1, H), lambda i: (0, 0)),
                  pl.BlockSpec((1, H), lambda i: (0, 0))],
        out_specs=(pl.BlockSpec((1, H), lambda i: (0, 0)),
                   pl.BlockSpec((1, H), lambda i: (0, 0))),
        scratch_shapes=[pltpu.VMEM((1, H), jnp.float32),
                        pltpu.VMEM((1, H), jnp.float32)],
        compiler_params=pltpu.CompilerParams(
            dimension_semantics=("arbitrary",)),
    )(x, gamma2, beta2)

    # --- pass 2: fused block, batch-tiled ------------------------------------
    # VMEM budget: double-buffered activation tiles + resident bf16 weights,
    # clamped to v7x's 64 MiB physical VMEM.
    act_bytes = 2 * (TB * H * 4 + TB * H * 4 + TB * H4 * 4)
    weight_bytes = 2 * (H * H4 + H4 * H) * 2
    vmem_limit = int(min(max(act_bytes + weight_bytes + (8 << 20), 16 << 20),
                         64 << 20))

    out = pl.pallas_call(
        functools.partial(_block_kernel, float(dropout_p), keep_threshold),
        out_shape=jax.ShapeDtypeStruct((B, H), x.dtype),
        grid=grid,
        in_specs=[pl.BlockSpec((TB, H), lambda i: (i, 0)),    # x tile
                  pl.BlockSpec((1, H), lambda i: (0, 0)),     # scale (resident)
                  pl.BlockSpec((1, H), lambda i: (0, 0)),     # shift (resident)
                  pl.BlockSpec((H, H4), lambda i: (0, 0)),    # w1    (resident)
                  pl.BlockSpec((1, H4), lambda i: (0, 0)),    # b1    (resident)
                  pl.BlockSpec((H4, H), lambda i: (0, 0)),    # w2    (resident)
                  pl.BlockSpec((1, H), lambda i: (0, 0)),     # b2    (resident)
                  pl.BlockSpec((TB, H4), lambda i: (i, 0))],  # dropout bits tile
        out_specs=pl.BlockSpec((TB, H), lambda i: (i, 0)),
        compiler_params=pltpu.CompilerParams(
            dimension_semantics=("parallel",),
            vmem_limit_bytes=vmem_limit),
    )(x, scale, shift, w1_bf, b1_2, w2_bf, b2_2, rbits)
    return out


if __name__ == "__main__":
    B, H = 64, 128          # small, lane-dense (H multiple of 128), 2 batch tiles
    DROPOUT_P = 0.1

    key = jax.random.PRNGKey(0)
    kx, k1, k2, k3, k4, kd = jax.random.split(key, 6)

    x = jax.random.normal(kx, (B, H), dtype=jnp.float32)

    # Deterministic synthetic parameters (shapes follow nn.Module __init__).
    gamma = jnp.ones((H,), jnp.float32)                                # norm.weight
    beta = jnp.zeros((H,), jnp.float32)                                # norm.bias
    w1 = jax.random.normal(k1, (H, 4 * H), dtype=jnp.float32) * 0.05   # fc1.weight.T
    b1 = jax.random.normal(k2, (4 * H,), dtype=jnp.float32) * 0.05     # fc1.bias
    w2 = jax.random.normal(k3, (4 * H, H), dtype=jnp.float32) * 0.05   # fc2.weight.T
    b2 = jax.random.normal(k4, (H,), dtype=jnp.float32) * 0.05         # fc2.bias

    out = block_with_dropout(x, gamma, beta, w1, b1, w2, b2, kd,
                             dropout_p=DROPOUT_P)
    jax.block_until_ready(out)
    assert out.shape == (B, H) and out.dtype == jnp.float32
    assert bool(jnp.all(jnp.isfinite(out)))
    print("KERNEL_OK")
</pallas_src>

<mosaic_0001>
module attributes {stable_mosaic.version = 11 : i64} {
  func.func @_bn_stats_kernel(%arg0: i32, %arg1: memref<32x128xf32, #tpu.memory_space<vmem>>, %arg2: memref<1x128xf32, #tpu.memory_space<vmem>>, %arg3: memref<1x128xf32, #tpu.memory_space<vmem>>, %arg4: memref<1x128xf32, #tpu.memory_space<vmem>>, %arg5: memref<1x128xf32, #tpu.memory_space<vmem>>, %arg6: memref<1x128xf32, #tpu.memory_space<vmem>>, %arg7: memref<1x128xf32, #tpu.memory_space<vmem>>) attributes {dimension_semantics = [#tpu.dimension_semantics<arbitrary>], iteration_bounds = array<i64: 2>, scalar_prefetch = 0 : i64, scratch_operands = 2 : i64, tpu.core_type = #tpu.core_type<tc>, window_params = [{transform_indices = @transform_0, window_bounds = array<i64: 32, 128>}, {pipeline_mode = #tpu.pipeline_mode<synchronous>, transform_indices = @transform_1, window_bounds = array<i64: 1, 128>}, {pipeline_mode = #tpu.pipeline_mode<synchronous>, transform_indices = @transform_2, window_bounds = array<i64: 1, 128>}, {pipeline_mode = #tpu.pipeline_mode<synchronous>, transform_indices = @transform_3, window_bounds = array<i64: 1, 128>}, {pipeline_mode = #tpu.pipeline_mode<synchronous>, transform_indices = @transform_4, window_bounds = array<i64: 1, 128>}]} {
    %c0_i32 = arith.constant 0 : i32
    %0 = arith.cmpi eq, %arg0, %c0_i32 : i32
    %1 = arith.extui %0 : i1 to i32
    %c0_i32_0 = arith.constant 0 : i32
    %2 = arith.cmpi ne, %1, %c0_i32_0 : i32
    scf.if %2 {
      %cst_12 = arith.constant 0.000000e+00 : f32
      %18 = vector.broadcast %cst_12 : f32 to vector<1x128xf32>
      %c0_13 = arith.constant 0 : index
      %c0_14 = arith.constant 0 : index
      %19 = vector.load %arg6[%c0_13, %c0_14] : memref<1x128xf32, #tpu.memory_space<vmem>>, vector<1x128xf32>
      tpu.vector_store %arg6[%c0_13, %c0_14], %18 {strides = array<i32>} : memref<1x128xf32, #tpu.memory_space<vmem>>, vector<1x128xf32>,
      %cst_15 = arith.constant 0.000000e+00 : f32
      %20 = vector.broadcast %cst_15 : f32 to vector<1x128xf32>
      %c0_16 = arith.constant 0 : index
      %c0_17 = arith.constant 0 : index
      %21 = vector.load %arg7[%c0_16, %c0_17] : memref<1x128xf32, #tpu.memory_space<vmem>>, vector<1x128xf32>
      tpu.vector_store %arg7[%c0_16, %c0_17], %20 {strides = array<i32>} : memref<1x128xf32, #tpu.memory_space<vmem>>, vector<1x128xf32>,
    } else {
    }
    %c0 = arith.constant 0 : index
    %c0_1 = arith.constant 0 : index
    %3 = vector.load %arg1[%c0, %c0_1] : memref<32x128xf32, #tpu.memory_space<vmem>>, vector<32x128xf32>
    %c0_2 = arith.constant 0 : index
    %c0_3 = arith.constant 0 : index
    %4 = vector.load %arg6[%c0_2, %c0_3] : memref<1x128xf32, #tpu.memory_space<vmem>>, vector<1x128xf32>
    %cst = arith.constant dense<0.000000e+00> : vector<128xf32>
    %5 = vector.multi_reduction <add>, %3, %cst [0] : vector<32x128xf32> to vector<128xf32>
    %6 = vector.shape_cast %5 : vector<128xf32> to vector<1x128xf32>
    %7 = arith.addf %4, %6 : vector<1x128xf32>
    %c0_4 = arith.constant 0 : index
    %c0_5 = arith.constant 0 : index
    %8 = vector.load %arg6[%c0_4, %c0_5] : memref<1x128xf32, #tpu.memory_space<vmem>>, vector<1x128xf32>
    tpu.vector_store %arg6[%c0_4, %c0_5], %7 {strides = array<i32>} : memref<1x128xf32, #tpu.memory_space<vmem>>, vector<1x128xf32>,
    %c0_6 = arith.constant 0 : index
    %c0_7 = arith.constant 0 : index
    %9 = vector.load %arg7[%c0_6, %c0_7] : memref<1x128xf32, #tpu.memory_space<vmem>>, vector<1x128xf32>
    %10 = arith.mulf %3, %3 : vector<32x128xf32>
    %cst_8 = arith.constant dense<0.000000e+00> : vector<128xf32>
    %11 = vector.multi_reduction <add>, %10, %cst_8 [0] : vector<32x128xf32> to vector<128xf32>
    %12 = vector.shape_cast %11 : vector<128xf32> to vector<1x128xf32>
    %13 = arith.addf %9, %12 : vector<1x128xf32>
    %c0_9 = arith.constant 0 : index
    %c0_10 = arith.constant 0 : index
    %14 = vector.load %arg7[%c0_9, %c0_10] : memref<1x128xf32, #tpu.memory_space<vmem>>, vector<1x128xf32>
    tpu.vector_store %arg7[%c0_9, %c0_10], %13 {strides = array<i32>} : memref<1x128xf32, #tpu.memory_space<vmem>>, vector<1x128xf32>,
    %c1_i32 = arith.constant 1 : i32
    %15 = arith.cmpi eq, %arg0, %c1_i32 : i32
    %16 = arith.extui %15 : i1 to i32
    %c0_i32_11 = arith.constant 0 : i32
    %17 = arith.cmpi ne, %16, %c0_i32_11 : i32
    scf.if %17 {
      %c0_12 = arith.constant 0 : index
      %c0_13 = arith.constant 0 : index
      %18 = vector.load %arg6[%c0_12, %c0_13] : memref<1x128xf32, #tpu.memory_space<vmem>>, vector<1x128xf32>
      %cst_14 = arith.constant 1.562500e-02 : f32
      %19 = vector.broadcast %cst_14 : f32 to vector<1x128xf32>
      %20 = arith.mulf %18, %19 : vector<1x128xf32>
      %c0_15 = arith.constant 0 : index
      %c0_16 = arith.constant 0 : index
      %21 = vector.load %arg7[%c0_15, %c0_16] : memref<1x128xf32, #tpu.memory_space<vmem>>, vector<1x128xf32>
      %cst_17 = arith.constant 1.562500e-02 : f32
      %22 = vector.broadcast %cst_17 : f32 to vector<1x128xf32>
      %23 = arith.mulf %21, %22 : vector<1x128xf32>
      %24 = arith.mulf %20, %20 : vector<1x128xf32>
      %25 = arith.subf %23, %24 : vector<1x128xf32>
      %cst_18 = arith.constant 0.000000e+00 : f32
      %26 = vector.broadcast %cst_18 : f32 to vector<1x128xf32>
      %27 = arith.maximumf %25, %26 : vector<1x128xf32>
      %c0_19 = arith.constant 0 : index
      %c0_20 = arith.constant 0 : index
      %28 = vector.load %arg2[%c0_19, %c0_20] : memref<1x128xf32, #tpu.memory_space<vmem>>, vector<1x128xf32>
      %cst_21 = arith.constant 9.99999974E-6 : f32
      %29 = vector.broadcast %cst_21 : f32 to vector<1x128xf32>
      %30 = arith.addf %27, %29 : vector<1x128xf32>
      %31 = math.rsqrt %30 : vector<1x128xf32>
      %32 = arith.mulf %28, %31 : vector<1x128xf32>
      %c0_22 = arith.constant 0 : index
      %c0_23 = arith.constant 0 : index
      %33 = vector.load %arg4[%c0_22, %c0_23] : memref<1x128xf32, #tpu.memory_space<vmem>>, vector<1x128xf32>
      tpu.vector_store %arg4[%c0_22, %c0_23], %32 {strides = array<i32>} : memref<1x128xf32, #tpu.memory_space<vmem>>, vector<1x128xf32>,
      %c0_24 = arith.constant 0 : index
      %c0_25 = arith.constant 0 : index
      %34 = vector.load %arg3[%c0_24, %c0_25] : memref<1x128xf32, #tpu.memory_space<vmem>>, vector<1x128xf32>
      %35 = arith.mulf %20, %32 : vector<1x128xf32>
      %36 = arith.subf %34, %35 : vector<1x128xf32>
      %c0_26 = arith.constant 0 : index
      %c0_27 = arith.constant 0 : index
      %37 = vector.load %arg5[%c0_26, %c0_27] : memref<1x128xf32, #tpu.memory_space<vmem>>, vector<1x128xf32>
      tpu.vector_store %arg5[%c0_26, %c0_27], %36 {strides = array<i32>} : memref<1x128xf32, #tpu.memory_space<vmem>>, vector<1x128xf32>,
    } else {
    }
    return
  }
  func.func @transform_0(%arg0: i32) -> (i32, i32) {
    %c0_i32 = arith.constant 0 : i32
    %c0_i32_0 = arith.constant 0 : i32
    return %arg0, %c0_i32 : i32, i32
  }
  func.func @transform_1(%arg0: i32) -> (i32, i32) {
    %c0_i32 = arith.constant 0 : i32
    %c0_i32_0 = arith.constant 0 : i32
    %c0_i32_1 = arith.constant 0 : i32
    return %c0_i32, %c0_i32_0 : i32, i32
  }
  func.func @transform_2(%arg0: i32) -> (i32, i32) {
    %c0_i32 = arith.constant 0 : i32
    %c0_i32_0 = arith.constant 0 : i32
    %c0_i32_1 = arith.constant 0 : i32
    return %c0_i32, %c0_i32_0 : i32, i32
  }
  func.func @transform_3(%arg0: i32) -> (i32, i32) {
    %c0_i32 = arith.constant 0 : i32
    %c0_i32_0 = arith.constant 0 : i32
    %c0_i32_1 = arith.constant 0 : i32
    return %c0_i32, %c0_i32_0 : i32, i32
  }
  func.func @transform_4(%arg0: i32) -> (i32, i32) {
    %c0_i32 = arith.constant 0 : i32
    %c0_i32_0 = arith.constant 0 : i32
    %c0_i32_1 = arith.constant 0 : i32
    return %c0_i32, %c0_i32_0 : i32, i32
  }
}

</mosaic_0001>

<llo_original>
// kernel: tpu_custom_call.1
$region0: #{tpu_custom_call.1}
  #allocation0 [shape = 'u32[]', space=smem, size = 0x4, offset = 0x4, fixed_abs, tag = 'smem constant byte address 0x4 - core index']
  #allocation1 [shape = 'u32[144,128]{1,0:T(1,128)}', space=vmem, size = 0x12000, scoped, tag = 'internal scratch']
  #allocation2 [shape = 'f32[1,128]{1,0:T(1,128)}', space=vmem, size = 0x200, scoped, tag = 'scratch operand']
  #allocation3 [shape = 'f32[1,128]{1,0:T(1,128)}', space=vmem, size = 0x200, scoped, tag = 'scratch operand']
  %s0 = inlined_call_operand.hbm [shape: f32[64,128], index: 0, kind: input, shape index: {}]
  %s1 = inlined_call_operand.vmem [shape: f32[1,128], index: 1, kind: input, shape index: {}]
  %s2 = inlined_call_operand.vmem [shape: f32[1,128], index: 2, kind: input, shape index: {}]
  %s3 = inlined_call_operand.hbm [shape: f32[1,128], index: 3, kind: output, shape index: {0}]
  %s4 = inlined_call_operand.hbm [shape: f32[1,128], index: 4, kind: output, shape index: {1}]
  %5 = xla_tuple %s3, %s4
  %s6 = sld [smem:[#allocation0]]
  $region65: #{tpu_custom_call.1} parent=0
    _
  %s8 = ssub.s32 1, %s6
  %s9 = scalar_select 0, %s8, %s6
  $region1: #{tpu_custom_call.1} parent=0
    #allocation4 [shape = 'u8[32768]{0}', space=vmem, size = 0x8000, scoped, tag = 'input window, operand 0']
    #allocation5 [shape = 's32[2]{0}', space=sflag, size = 0x8, scoped, tag = 'scoped memory for tpu_custom_call.1']
    #allocation6 [shape = 's32[2]{0}', space=sflag, size = 0x8, scoped, tag = 'scoped memory for tpu_custom_call.1']
    #allocation7 [shape = 'u8[512]{0}', space=vmem, size = 0x400, scoped, tag = 'output window, operand 0, single buffered']
    #allocation8 [shape = 'u8[512]{0}', space=vmem, size = 0x400, scoped, tag = 'output window, operand 1, single buffered']
    #allocation9 [shape = 's32[1]{0}', space=sflag, size = 0x4, scoped, tag = 'scoped memory for tpu_custom_call.1']
    %10 = vsyncpa [#allocation5], 0
    %s11 = scalar_lea.sflag [#allocation5], 1
    %12 = vsyncpa %s11, 0
    %13 = vsyncpa [#allocation6], 0
    %14 = vsyncpa [#allocation9], 0
    loop: start=0, step=1, limit=4
    $region2: #{tpu_custom_call.1} parent=1 // loop_pre_header
      _
    $region3: #{tpu_custom_call.1} parent=1 // loop_header
      %s16 = sphi 0, %s20
      %p17 = scmp.ge.s32.totalorder %s16, 4
      %s26 = sphi 0, %s28
      %s29 = sphi 0, %s26
      %s30 = sphi 0, %s29
      %s46 = sphi 0, %s30
      %s50 = sphi 0, %s50
      %s52 = sphi 0, %s50
      %s53 = sphi 0, %s52
      %s67 = sphi 0, %s53
      %s71 = sphi 0, %s71
      %s73 = sphi 0, %s71
      %s74 = sphi 0, %s73
      %s88 = sphi 0, %s74
      %s92 = sphi 0, %s92
      %s94 = sphi 0, %s92
      %s95 = sphi 0, %s94
      %s109 = sphi 0, %s95
      %s113 = sphi 0, %s113
      %s115 = sphi 0, %s113
      %s116 = sphi 0, %s115
      %s130 = sphi 0, %s116
    $region4: #{tpu_custom_call.1} parent=1 // loop_header_branch
      %19 = sbr.rel (%p17) target = $region8
    $region5: #{tpu_custom_call.1} parent=1 // loop_body
      %s21 = ssub.s32 %s16, 1
      %s22 = ssub.s32 %s16, 2
      %s23 = sadd.s32 %s16, 1
      %s24 = ssub.s32 %s16, %s23
      %p25 = scmp.eq.s32.totalorder %s24, 0
      %s27 = sadd.s32 %s26, 1
      %s28 = scalar_select %p25, %s26, %s27
      %p31 = pneg %p25
      %p32 = scmp.eq.s32.totalorder %s16, 1
      %p33 = por %p31, %p32
      %p34 = scmp.ne.s32.totalorder %s26, %s29
      %p35 = scmp.eq.s32.totalorder %s16, 0
      %p36 = por %p34, %p35
      %p37 = scmp.ne.s32.totalorder %s26, %s29
      %p38 = scmp.eq.s32.totalorder %s21, 1
      %p39 = por %p37, %p38
      %p40 = scmp.ne.s32.totalorder %s29, %s30
      %p41 = scmp.eq.s32.totalorder %s21, 0
      %p42 = por %p40, %p41
      %p43 = scmp.ne.s32.totalorder %s29, %s30
      %p44 = scmp.eq.s32.totalorder %s22, 1
      %p45 = por %p43, %p44
      %p47 = scmp.ne.s32.totalorder %s30, %s46
      %p48 = scmp.eq.s32.totalorder %s22, 0
      %p49 = por %p47, %p48
      %s51 = sadd.s32 %s50, 1
      %p54 = scmp.eq.s32.totalorder %s16, 1
      %p55 = scmp.ne.s32.totalorder %s50, %s52
      %p56 = scmp.eq.s32.totalorder %s16, 0
      %p57 = por %p55, %p56
      %p58 = scmp.ne.s32.totalorder %s50, %s52
      %p59 = scmp.eq.s32.totalorder %s21, 1
      %p60 = por %p58, %p59
      %p61 = scmp.ne.s32.totalorder %s52, %s53
      %p62 = scmp.eq.s32.totalorder %s21, 0
      %p63 = por %p61, %p62
      %p64 = scmp.ne.s32.totalorder %s52, %s53
      %p65 = scmp.eq.s32.totalorder %s22, 1
      %p66 = por %p64, %p65
      %p68 = scmp.ne.s32.totalorder %s53, %s67
      %p69 = scmp.eq.s32.totalorder %s22, 0
      %p70 = por %p68, %p69
      %s72 = sadd.s32 %s71, 1
      %p75 = scmp.eq.s32.totalorder %s16, 1
      %p76 = scmp.ne.s32.totalorder %s71, %s73
      %p77 = scmp.eq.s32.totalorder %s16, 0
      %p78 = por %p76, %p77
      %p79 = scmp.ne.s32.totalorder %s71, %s73
      %p80 = scmp.eq.s32.totalorder %s21, 1
      %p81 = por %p79, %p80
      %p82 = scmp.ne.s32.totalorder %s73, %s74
      %p83 = scmp.eq.s32.totalorder %s21, 0
      %p84 = por %p82, %p83
      %p85 = scmp.ne.s32.totalorder %s73, %s74
      %p86 = scmp.eq.s32.totalorder %s22, 1
      %p87 = por %p85, %p86
      %p89 = scmp.ne.s32.totalorder %s74, %s88
      %p90 = scmp.eq.s32.totalorder %s22, 0
      %p91 = por %p89, %p90
      %s93 = sadd.s32 %s92, 1
      %p96 = scmp.eq.s32.totalorder %s16, 1
      %p97 = scmp.ne.s32.totalorder %s92, %s94
      %p98 = scmp.eq.s32.totalorder %s16, 0
      %p99 = por %p97, %p98
      %p100 = scmp.ne.s32.totalorder %s92, %s94
      %p101 = scmp.eq.s32.totalorder %s21, 1
      %p102 = por %p100, %p101
      %p103 = scmp.ne.s32.totalorder %s94, %s95
      %p104 = scmp.eq.s32.totalorder %s21, 0
      %p105 = por %p103, %p104
      %p106 = scmp.ne.s32.totalorder %s94, %s95
      %p107 = scmp.eq.s32.totalorder %s22, 1
      %p108 = por %p106, %p107
      %p110 = scmp.ne.s32.totalorder %s95, %s109
      %p111 = scmp.eq.s32.totalorder %s22, 0
      %p112 = por %p110, %p111
      %s114 = sadd.s32 %s113, 1
      %p117 = scmp.eq.s32.totalorder %s16, 1
      %p118 = scmp.ne.s32.totalorder %s113, %s115
      %p119 = scmp.eq.s32.totalorder %s16, 0
      %p120 = por %p118, %p119
      %p121 = scmp.ne.s32.totalorder %s113, %s115
      %p122 = scmp.eq.s32.totalorder %s21, 1
      %p123 = por %p121, %p122
      %p124 = scmp.ne.s32.totalorder %s115, %s116
      %p125 = scmp.eq.s32.totalorder %s21, 0
      %p126 = por %p124, %p125
      %p127 = scmp.ne.s32.totalorder %s115, %s116
      %p128 = scmp.eq.s32.totalorder %s22, 1
      %p129 = por %p127, %p128
      %p131 = scmp.ne.s32.totalorder %s116, %s130
      %p132 = scmp.eq.s32.totalorder %s22, 0
      %p133 = por %p131, %p132
      %p134 = scmp.le.s32.totalorder 1, %s16
      %p135 = scmp.lt.s32.totalorder %s16, 3
      %p136 = pnand %p134, %p135
      %p137 = pneg %p136
      // Predicated region
      $region9: #{tpu_custom_call.1} parent=5 // pred_check
        _
      $region10: #{tpu_custom_call.1} parent=5 // pred_check_branch
        %139 = sbr.rel (%p136) target = $region12
      $region11: #{tpu_custom_call.1} parent=5 // pred_region
        %s140 = ssub.s32 %s16, 1
        // Predicated region
        $region13: #{tpu_custom_call.1} parent=11 // pred_check
          %p141 = pneg %p63
        $region14: #{tpu_custom_call.1} parent=11 // pred_check_branch
          %143 = sbr.rel (%p141) target = $region16
        $region15: #{tpu_custom_call.1} parent=11 // pred_region
          _
        $region16: #{tpu_custom_call.1} parent=11 // pred_fallthru
          _
        // Predicated region
        $region17: #{tpu_custom_call.1} parent=11 // pred_check
          %p144 = pneg %p84
        $region18: #{tpu_custom_call.1} parent=11 // pred_check_branch
          %146 = sbr.rel (%p144) target = $region20
        $region19: #{tpu_custom_call.1} parent=11 // pred_region
          _
        $region20: #{tpu_custom_call.1} parent=11 // pred_fallthru
          _
      $region12: #{tpu_custom_call.1} parent=5 // pred_fallthru
        _
      %p147 = scmp.lt.s32.totalorder %s16, 2
      // Predicated region
      $region21: #{tpu_custom_call.1} parent=5 // pred_check
        %p148 = pneg %p147
      $region22: #{tpu_custom_call.1} parent=5 // pred_check_branch
        %150 = sbr.rel (%p148) target = $region24
      $region23: #{tpu_custom_call.1} parent=5 // pred_region
        // Predicated region
        $region25: #{tpu_custom_call.1} parent=23 // pred_check
          %p151 = pneg %p36
        $region26: #{tpu_custom_call.1} parent=23 // pred_check_branch
          %153 = sbr.rel (%p151) target = $region28
        $region27: #{tpu_custom_call.1} parent=23 // pred_region
          %s154 = sand.u32 %s26, 1
          %s155 = scalar_lea.sflag [#allocation5], %s154
          %s156 = sand.u32 %s26, 1
          %s157 = smul.addr %s156, 32
          %s158 = scalar_lea.vmem [#allocation4], %s157
          %s159 = smul.u32 4, %s16
          %s161 = ssub.s32 512, 512
          %162 = vsyncadd %s155, %s161
          %s163 = smul.addr %s159, 128
          %s164 = scalar_lea.hbm %s0, %s163
          %s165 = sshll.u32 %s158, 4
          %s166 = int_to_ptr.vmem [resolvable:$true] %s165
          %171 = dma.hbm_to_vmem [thread:$0]  %s164, 512, %s166, %s155, 128, 128, 8
        $region28: #{tpu_custom_call.1} parent=23 // pred_fallthru
          _
      $region24: #{tpu_custom_call.1} parent=5 // pred_fallthru
        _
      %p172 = scmp.le.s32.totalorder 1, %s16
      %p173 = scmp.lt.s32.totalorder %s16, 3
      %p174 = pnand %p172, %p173
      %p175 = pneg %p174
      // Predicated region
      $region29: #{tpu_custom_call.1} parent=5 // pred_check
        _
      $region30: #{tpu_custom_call.1} parent=5 // pred_check_branch
        %177 = sbr.rel (%p174) target = $region32
      $region31: #{tpu_custom_call.1} parent=5 // pred_region
        %s178 = ssub.s32 %s16, 1
        %s179 = sand.u32 %s29, 1
        %s180 = scalar_lea.sflag [#allocation5], %s179
        %s181 = sand.u32 %s29, 1
        %s182 = smul.addr %s181, 32
        %s183 = scalar_lea.vmem [#allocation4], %s182
        // Predicated region
        $region33: #{tpu_custom_call.1} parent=31 // pred_check
          %p184 = pneg %p42
        $region34: #{tpu_custom_call.1} parent=31 // pred_check_branch
          %186 = sbr.rel (%p184) target = $region36
        $region35: #{tpu_custom_call.1} parent=31 // pred_region
          %187 = dma.done %s180, 512
        $region36: #{tpu_custom_call.1} parent=31 // pred_fallthru
          _
        %s188 = sand.u32 %s29, 1
        %s189 = scalar_lea.sflag [#allocation5], %s188
        %s190 = sand.u32 %s29, 1
        %s191 = smul.addr %s190, 32
        %s192 = scalar_lea.vmem [#allocation4], %s191
        %p193 = pneg %p42
        %p194 = pneg %p39
        %p195 = pneg %p63
        %p196 = pneg %p60
        %p197 = pneg %p84
        %p198 = pneg %p81
        %p199 = pneg %p105
        %p200 = pneg %p102
        %p201 = pneg %p126
        %p202 = pneg %p123
        %s203 = smul.u32 4, %s21
        %p204 = scmp.eq.s32.totalorder %s21, 0
        // Predicated region
        $region37: #{tpu_custom_call.1} parent=31 // pred_check
          %p205 = pneg %p204
        $region38: #{tpu_custom_call.1} parent=31 // pred_check_branch
          %207 = sbr.rel (%p205) target = $region40
        $region39: #{tpu_custom_call.1} parent=31 // pred_region
          %208 = vst [vmem:[#allocation2] sm:$0x1] 0.0
          %209 = vst [vmem:[#allocation3] sm:$0x1] 0.0
        $region40: #{tpu_custom_call.1} parent=31 // pred_fallthru
          _
        %v210 = vld [vmem:[%s183] sm:$0xff]
        %v211 = vld [vmem:[%s183 + $0x8] sm:$0xff]
        %v212 = vld [vmem:[%s183 + $0x10] sm:$0xff]
        %v213 = vld [vmem:[%s183 + $0x18] sm:$0xff]
        %v214 = vld [vmem:[#allocation2] sm:$0x1]
        %v215 = vadd.f32 %v210, %v211
        %v216 = vadd.f32 %v215, %v212
        %v217 = vadd.f32 %v216, %v213
        %v218 = vrot.slane %v217, 4
        %v219 = vadd.f32 %v217, %v218
        %v220 = vrot.slane %v219, 2
        %v221 = vadd.f32 %v219, %v220
        %v222 = vrot.slane %v221, 1
        %v223 = vadd.f32 %v221, %v222
        %v224 = vadd.f32 %v214, %v223
        %225 = vst [vmem:[#allocation2] sm:$0x1] %v224
        %v226 = vld [vmem:[#allocation3] sm:$0x1]
        %v227 = vmul.f32 %v210, %v210
        %v228 = vmul.f32 %v211, %v211
        %v229 = vmul.f32 %v212, %v212
        %v230 = vmul.f32 %v213, %v213
        %v231 = vadd.f32 %v227, %v228
        %v232 = vadd.f32 %v231, %v229
        %v233 = vadd.f32 %v232, %v230
        %v234 = vrot.slane %v233, 4
        %v235 = vadd.f32 %v233, %v234
        %v236 = vrot.slane %v235, 2
        %v237 = vadd.f32 %v235, %v236
        %v238 = vrot.slane %v237, 1
        %v239 = vadd.f32 %v237, %v238
        %v240 = vadd.f32 %v226, %v239
        %241 = vst [vmem:[#allocation3] sm:$0x1] %v240
        %p242 = scmp.eq.s32.totalorder %s21, 1
        // Predicated region
        $region41: #{tpu_custom_call.1} parent=31 // pred_check
          %p243 = pneg %p242
        $region42: #{tpu_custom_call.1} parent=31 // pred_check_branch
          %245 = sbr.rel (%p243) target = $region44
        $region43: #{tpu_custom_call.1} parent=31 // pred_region
          %v246 = vld [vmem:[#allocation2] sm:$0x1]
          %v247 = vmul.f32 %v246, 0.015625
          %v248 = vld [vmem:[#allocation3] sm:$0x1]
          %v249 = vmul.f32 %v248, 0.015625
          %v250 = vmul.f32 %v247, %v247
          %v251 = vsub.f32 %v249, %v250
          %v252 = vmax.f32 %v251, 0.0
          %v253 = vld [vmem:[%s1] sm:$0x1]
          %v254 = vadd.f32 %v252, 1e-05
          %v255 = vrsqrt.pop %v254
          %v256 = vmul.f32 %v253, %v255
          %257 = vst [vmem:[#allocation7] sm:$0x1] %v256
          %v258 = vld [vmem:[%s2] sm:$0x1]
          %v259 = vmul.f32 %v247, %v256
          %v260 = vsub.f32 %v258, %v259
          %261 = vst [vmem:[#allocation8] sm:$0x1] %v260
        $region44: #{tpu_custom_call.1} parent=31 // pred_fallthru
          _
        // Predicated region
        $region45: #{tpu_custom_call.1} parent=31 // pred_check
          %p262 = pneg %p102
        $region46: #{tpu_custom_call.1} parent=31 // pred_check_branch
          %264 = sbr.rel (%p262) target = $region48
        $region47: #{tpu_custom_call.1} parent=31 // pred_region
          %s266 = ssub.s32 16, 16
          %267 = vsyncadd [#allocation6], %s266
          %s269 = sshll.u32 [#allocation7], 4
          %s270 = int_to_ptr.vmem [resolvable:$true] %s269
          %272 = dma.vmem_to_hbm [thread:$0]  %s270, 16, %s3, [#allocation6]
        $region48: #{tpu_custom_call.1} parent=31 // pred_fallthru
          _
        // Predicated region
        $region49: #{tpu_custom_call.1} parent=31 // pred_check
          %p273 = pneg %p123
        $region50: #{tpu_custom_call.1} parent=31 // pred_check_branch
          %275 = sbr.rel (%p273) target = $region52
        $region51: #{tpu_custom_call.1} parent=31 // pred_region
          %s277 = ssub.s32 16, 16
          %278 = vsyncadd [#allocation9], %s277
          %s280 = sshll.u32 [#allocation8], 4
          %s281 = int_to_ptr.vmem [resolvable:$true] %s280
          %283 = dma.vmem_to_hbm [thread:$0]  %s281, 16, %s4, [#allocation9]
        $region52: #{tpu_custom_call.1} parent=31 // pred_fallthru
          _
        // Predicated region
        $region53: #{tpu_custom_call.1} parent=31 // pred_check
          %p284 = pneg %p102
        $region54: #{tpu_custom_call.1} parent=31 // pred_check_branch
          %286 = sbr.rel (%p284) target = $region56
        $region55: #{tpu_custom_call.1} parent=31 // pred_region
          %287 = dma.done [#allocation6], 16
        $region56: #{tpu_custom_call.1} parent=31 // pred_fallthru
          _
        // Predicated region
        $region57: #{tpu_custom_call.1} parent=31 // pred_check
          %p288 = pneg %p123
        $region58: #{tpu_custom_call.1} parent=31 // pred_check_branch
          %290 = sbr.rel (%p288) target = $region60
        $region59: #{tpu_custom_call.1} parent=31 // pred_region
          %291 = dma.done [#allocation9], 16
        $region60: #{tpu_custom_call.1} parent=31 // pred_fallthru
          _
      $region32: #{tpu_custom_call.1} parent=5 // pred_fallthru
        _
      %p292 = scmp.le.s32.totalorder 2, %s16
      // Predicated region
      $region61: #{tpu_custom_call.1} parent=5 // pred_check
        %p293 = pneg %p292
      $region62: #{tpu_custom_call.1} parent=5 // pred_check_branch
        %295 = sbr.rel (%p293) target = $region64
      $region63: #{tpu_custom_call.1} parent=5 // pred_region
        %s296 = ssub.s32 %s16, 2
      $region64: #{tpu_custom_call.1} parent=5 // pred_fallthru
        _
    $region6: #{tpu_custom_call.1} parent=1 // loop_footer
      %s20 = sadd.s32 1, %s16
    $region7: #{tpu_custom_call.1} parent=1 // loop_footer_branch
      %15 = sbr.rel target = $region3
    $region8: #{tpu_custom_call.1} parent=1 // loop_exit
      _
    %297 = vsyncpa [#allocation5], 1
    %s298 = scalar_lea.sflag [#allocation5], 1
    %299 = vsyncpa %s298, 1
    %300 = vsyncpa [#allocation6], 1
    %s301 = scalar_lea.sflag [#allocation6], 1
    %302 = vsyncpa %s301, 1
    %303 = vsyncpa [#allocation9], 1

</llo_original>
